<compile_context>
chip_gen: v5e
topology: v5e:2x2
jax: 0.10.0
libtpu: 0.0.40
codegen_flags: <defaults>
</compile_context>

<pallas_src>
import functools
import math

import jax
import jax.numpy as jnp
from jax import lax
from jax.experimental import pallas as pl
from jax.experimental.pallas import tpu as pltpu


_MASK_VAL = -1e30  # finite "-inf": keeps exp() NaN-free in every corner case


def _pick_tile(dim, candidates):
    """Largest candidate tile that divides `dim`, else the full dim."""
    for c in candidates:
        if dim % c == 0:
            return c
    return dim


def _vmem_limit_bytes():
    # v5e/v6e: 128 MiB VMEM per TensorCore; v7x: 64 MiB.  Budget 3/4 of it.
    try:
        cap = pltpu.get_tpu_info().vmem_capacity_bytes
    except Exception:
        cap = 64 * 1024 * 1024
    return int(min(96 * 1024 * 1024, (cap * 3) // 4))


# ----------------------------------------------------------------------------
# Kernel 1: tiled dense projection  y = x @ W + b   (c_attn and c_proj)
# ----------------------------------------------------------------------------
def _linear_kernel(x_ref, w_ref, b_ref, o_ref, acc_ref):
    @pl.when(pl.program_id(2) == 0)
    def _init():
        acc_ref[...] = jnp.zeros_like(acc_ref)

    # bf16 operands hit the native MXU rate; accumulation stays f32.
    acc_ref[...] += jnp.dot(
        x_ref[...].astype(jnp.bfloat16),
        w_ref[...].astype(jnp.bfloat16),
        preferred_element_type=jnp.float32,
    )

    @pl.when(pl.program_id(2) == pl.num_programs(2) - 1)
    def _finalize():
        o_ref[...] = (acc_ref[...] + b_ref[...].astype(jnp.float32)
                      ).astype(o_ref.dtype)


def linear(x, w, b, *, tm=None, tn=None, tk=None):
    M, K = x.shape
    K2, N = w.shape
    assert K == K2
    # Big tiles amortize the ~0.35us/grid-step overhead (mem-bound layers).
    tm = tm or _pick_tile(M, (512, 256, 128))
    tn = tn or _pick_tile(N, (512, 256, 128))
    tk = tk or _pick_tile(K, (1024, 512, 256, 128))
    assert M % tm == 0 and N % tn == 0 and K % tk == 0
    grid = (M // tm, N // tn, K // tk)
    return pl.pallas_call(
        _linear_kernel,
        out_shape=jax.ShapeDtypeStruct((M, N), x.dtype),
        grid=grid,
        in_specs=[
            pl.BlockSpec((tm, tk), lambda i, j, k: (i, k)),
            pl.BlockSpec((tk, tn), lambda i, j, k: (k, j)),
            pl.BlockSpec((1, tn), lambda i, j, k: (0, j)),
        ],
        out_specs=pl.BlockSpec((tm, tn), lambda i, j, k: (i, j)),
        scratch_shapes=[pltpu.VMEM((tm, tn), jnp.float32)],
        compiler_params=pltpu.CompilerParams(
            dimension_semantics=("parallel", "parallel", "arbitrary"),
            vmem_limit_bytes=_vmem_limit_bytes(),
        ),
    )(x, w, b.reshape(1, N))


# ----------------------------------------------------------------------------
# Kernel 2: flash-style causal attention on head-packed (B, T, C) blocks
# ----------------------------------------------------------------------------
def _flash_attn_kernel(q_ref, k_ref, v_ref, o_ref,
                       qs_ref, m_ref, l_ref, acc_ref,
                       *, n_head, head_dim, tq, tk):
    qi = pl.program_id(1)
    ki = pl.program_id(2)
    q_start = qi * tq
    k_start = ki * tk
    # Highest KV block index holding any unmasked column for this query block.
    # The KV index_map is clamped to the same value, so steps with ki > kmax
    # re-see an already-processed block and MUST skip compute.
    kmax = ((qi + 1) * tq - 1) // tk

    @pl.when(ki == 0)
    def _init():
        scale = 1.0 / math.sqrt(head_dim)
        # Scale + bf16-cast q once per (b, q-block); reused for every KV step.
        qs_ref[...] = (q_ref[0].astype(jnp.float32) * scale
                       ).astype(jnp.bfloat16)
        m_ref[...] = jnp.full_like(m_ref, _MASK_VAL)
        l_ref[...] = jnp.zeros_like(l_ref)
        acc_ref[...] = jnp.zeros_like(acc_ref)

    @pl.when(ki <= kmax)
    def _compute():
        def run(mask):
            for h in range(n_head):
                sl = slice(h * head_dim, (h + 1) * head_dim)
                qh = qs_ref[:, sl]                              # bf16, scaled
                kh = k_ref[0, :, sl].astype(jnp.bfloat16)
                vh = v_ref[0, :, sl].astype(jnp.bfloat16)
                s = lax.dot_general(qh, kh, (((1,), (1,)), ((), ())),
                                    preferred_element_type=jnp.float32)
                if mask is not None:
                    s = jnp.where(mask, s, _MASK_VAL)
                m_prev = m_ref[h]                               # (tq, 1)
                m_new = jnp.maximum(m_prev,
                                    jnp.max(s, axis=-1, keepdims=True))
                alpha = jnp.exp(m_prev - m_new)
                p = jnp.exp(s - m_new)
                l_ref[h] = alpha * l_ref[h] + jnp.sum(p, axis=-1,
                                                      keepdims=True)
                acc_ref[h] = alpha * acc_ref[h] + jnp.dot(
                    p.astype(jnp.bfloat16), vh,
                    preferred_element_type=jnp.float32)
                m_ref[h] = m_new

        on_diag = k_start + tk > q_start   # block touches the causal diagonal

        @pl.when(on_diag)
        def _masked():
            row = q_start + lax.broadcasted_iota(jnp.int32, (tq, tk), 0)
            col = k_start + lax.broadcasted_iota(jnp.int32, (tq, tk), 1)
            run(row >= col)

        @pl.when(jnp.logical_not(on_diag))
        def _unmasked():                   # fully below diagonal: no select
            run(None)

    @pl.when(ki == pl.num_programs(2) - 1)
    def _finalize():
        inv = pl.reciprocal(l_ref[...], approx=True)           # (H, tq, 1)
        parts = [acc_ref[h] * inv[h] for h in range(n_head)]
        # One lane-dense (tq, C) store instead of n_head narrow stores.
        o_ref[0] = jnp.concatenate(parts, axis=-1).astype(o_ref.dtype)


def _attention_call(q_arr, k_arr, v_arr, col_blocks, *, n_embd, n_head,
                    block_q=None, block_k=None):
    """q/k/v arrays may all be the packed qkv tensor (fused split path)."""
    B, T, _ = q_arr.shape
    C = n_embd
    assert C % n_head == 0
    head_dim = C // n_head
    tq = block_q or _pick_tile(T, (128,))
    # NOTE: block_k=256 fills the 256-deep MXU on v6e/v7x; keep 128 on v5e.
    tk = block_k or tq
    assert T % tq == 0 and T % tk == 0
    nq, nk = T // tq, T // tk
    cq, ck, cv = col_blocks

    def q_map(b, qi, ki):
        return (b, qi, cq)

    def o_map(b, qi, ki):
        return (b, qi, 0)

    def kv_map(col):
        def f(b, qi, ki):
            # Clamp to the last block with unmasked columns for this query
            # block: fully-masked KV blocks are never DMA'd (the pipeline
            # skips the re-fetch when the block index repeats).
            kmax = ((qi + 1) * tq - 1) // tk
            return (b, jnp.minimum(ki, kmax), col)
        return f

    kernel = functools.partial(_flash_attn_kernel, n_head=n_head,
                               head_dim=head_dim, tq=tq, tk=tk)
    # TODO(synk): replace the rectangular (nq, nk) grid with a triangular 1-D
    # grid via PrefetchScalarGridSpec lookup tables to also remove the empty
    # grid-step overhead of the skipped iterations.
    return pl.pallas_call(
        kernel,
        out_shape=jax.ShapeDtypeStruct((B, T, C), q_arr.dtype),
        grid=(B, nq, nk),
        in_specs=[
            pl.BlockSpec((1, tq, C), q_map),
            pl.BlockSpec((1, tk, C), kv_map(ck)),
            pl.BlockSpec((1, tk, C), kv_map(cv)),
        ],
        out_specs=pl.BlockSpec((1, tq, C), o_map),
        scratch_shapes=[
            pltpu.VMEM((tq, C), jnp.bfloat16),                 # scaled q
            pltpu.VMEM((n_head, tq, 1), jnp.float32),          # m
            pltpu.VMEM((n_head, tq, 1), jnp.float32),          # l
            pltpu.VMEM((n_head, tq, head_dim), jnp.float32),   # acc
        ],
        compiler_params=pltpu.CompilerParams(
            dimension_semantics=("parallel", "parallel", "arbitrary"),
            vmem_limit_bytes=_vmem_limit_bytes(),
        ),
    )(q_arr, k_arr, v_arr)


# ----------------------------------------------------------------------------
# Module wrapper
# ----------------------------------------------------------------------------
def causal_self_attention(x, params, n_head, *, block_q=None, block_k=None,
                          lin_tiles=(None, None, None)):
    B, T, C = x.shape
    tm, tn, tk = lin_tiles

    qkv = linear(x.reshape(B * T, C), params["w_attn"], params["b_attn"],
                 tm=tm, tn=tn, tk=tk).reshape(B, T, 3 * C)

    if C % 128 == 0:
        # Fused QKV split: q/k/v are last-dim block indices 0/1/2 of the
        # packed tensor -> no HBM copies from jnp.split.
        y = _attention_call(qkv, qkv, qkv, (0, 1, 2), n_embd=C, n_head=n_head,
                            block_q=block_q, block_k=block_k)
    else:
        # TODO(synk): small-C fallback; the fused path needs C % 128 == 0
        # so the per-tensor lane block obeys the (8, 128) BlockSpec rule.
        q, k, v = jnp.split(qkv, 3, axis=2)
        y = _attention_call(q, k, v, (0, 0, 0), n_embd=C, n_head=n_head,
                            block_q=block_q, block_k=block_k)

    y = linear(y.reshape(B * T, C), params["w_proj"], params["b_proj"],
               tm=tm, tn=tn, tk=tk)
    return y.reshape(B, T, C)


def init_params(key, n_embd):
    # Mirrors nn.Linear default init: U(-1/sqrt(fan_in), 1/sqrt(fan_in)).
    k1, k2, k3, k4 = jax.random.split(key, 4)
    bound = 1.0 / math.sqrt(n_embd)
    return {
        # stored as (in, out) so forward is x @ W + b (== x @ W_torch.T + b)
        "w_attn": jax.random.uniform(k1, (n_embd, 3 * n_embd), jnp.float32,
                                     -bound, bound),
        "b_attn": jax.random.uniform(k2, (3 * n_embd,), jnp.float32,
                                     -bound, bound),
        "w_proj": jax.random.uniform(k3, (n_embd, n_embd), jnp.float32,
                                     -bound, bound),
        "b_proj": jax.random.uniform(k4, (n_embd,), jnp.float32,
                                     -bound, bound),
    }


# Pure-JAX (f32) reference for correctness checking
def _reference(x, params, n_head):
    B, T, C = x.shape
    hd = C // n_head
    qkv = x @ params["w_attn"] + params["b_attn"]
    q, k, v = jnp.split(qkv, 3, axis=2)
    q = q.reshape(B, T, n_head, hd).transpose(0, 2, 1, 3)
    k = k.reshape(B, T, n_head, hd).transpose(0, 2, 1, 3)
    v = v.reshape(B, T, n_head, hd).transpose(0, 2, 1, 3)
    s = jnp.einsum("bhqd,bhkd->bhqk", q, k) / math.sqrt(hd)
    mask = jnp.tril(jnp.ones((T, T), bool))
    s = jnp.where(mask, s, -jnp.inf)
    p = jax.nn.softmax(s, axis=-1)
    y = jnp.einsum("bhqk,bhkd->bhqd", p, v)
    y = y.transpose(0, 2, 1, 3).reshape(B, T, C)
    return y @ params["w_proj"] + params["b_proj"]


if __name__ == "__main__":
    key = jax.random.PRNGKey(0)
    kx, kp, kx2, kp2 = jax.random.split(key, 4)

    # --- tiny config (single-block path, C % 128 != 0 fallback) ---
    B, T, C, H = 2, 8, 32, 4
    x = jax.random.normal(kx, (B, T, C), jnp.float32)
    params = init_params(kp, C)
    out = jax.block_until_ready(causal_self_attention(x, params, H))
    ref = _reference(x, params, H)
    assert out.shape == (B, T, C)
    assert jnp.allclose(out, ref, atol=3e-2, rtol=3e-2), (
        f"tiny config mismatch: max abs err {jnp.max(jnp.abs(out - ref))}")

    # --- medium config (fused QKV specs, tiled grid, causal block skip,
    #     asymmetric tq=128 / tk=256 tiles) ---
    B2, T2, C2, H2 = 2, 512, 128, 2
    x2 = jax.random.normal(kx2, (B2, T2, C2), jnp.float32)
    params2 = init_params(kp2, C2)
    out2 = jax.block_until_ready(
        causal_self_attention(x2, params2, H2, block_q=128, block_k=256))
    ref2 = _reference(x2, params2, H2)
    assert out2.shape == (B2, T2, C2)
    assert jnp.allclose(out2, ref2, atol=3e-2, rtol=3e-2), (
        f"medium config mismatch: max abs err {jnp.max(jnp.abs(out2 - ref2))}")

    print("KERNEL_OK")
</pallas_src>

<mosaic_0001>
module attributes {stable_mosaic.version = 11 : i64} {
  func.func @_linear_kernel(%arg0: i32, %arg1: i32, %arg2: i32, %arg3: memref<16x32xf32, #tpu.memory_space<vmem>>, %arg4: memref<32x96xf32, #tpu.memory_space<vmem>>, %arg5: memref<1x96xf32, #tpu.memory_space<vmem>>, %arg6: memref<16x96xf32, #tpu.memory_space<vmem>>, %arg7: memref<16x96xf32, #tpu.memory_space<vmem>>) attributes {dimension_semantics = [#tpu.dimension_semantics<parallel>, #tpu.dimension_semantics<parallel>, #tpu.dimension_semantics<arbitrary>], iteration_bounds = array<i64: 1, 1, 1>, scalar_prefetch = 0 : i64, scratch_operands = 1 : i64, tpu.core_type = #tpu.core_type<tc>, window_params = [{transform_indices = @transform_0, window_bounds = array<i64: 16, 32>}, {transform_indices = @transform_1, window_bounds = array<i64: 32, 96>}, {transform_indices = @transform_2, window_bounds = array<i64: 1, 96>}, {transform_indices = @transform_3, window_bounds = array<i64: 16, 96>}]} {
    %c0_i32 = arith.constant 0 : i32
    %0 = arith.cmpi eq, %arg2, %c0_i32 : i32
    %1 = arith.extui %0 : i1 to i32
    %c0_i32_0 = arith.constant 0 : i32
    %2 = arith.cmpi ne, %1, %c0_i32_0 : i32
    scf.if %2 {
      %cst_10 = arith.constant 0.000000e+00 : f32
      %14 = vector.broadcast %cst_10 : f32 to vector<16x96xf32>
      %c0_11 = arith.constant 0 : index
      %c0_12 = arith.constant 0 : index
      %15 = vector.load %arg7[%c0_11, %c0_12] : memref<16x96xf32, #tpu.memory_space<vmem>>, vector<16x96xf32>
      tpu.vector_store %arg7[%c0_11, %c0_12], %14 {strides = array<i32>} : memref<16x96xf32, #tpu.memory_space<vmem>>, vector<16x96xf32>,
    } else {
    }
    %c0 = arith.constant 0 : index
    %c0_1 = arith.constant 0 : index
    %3 = vector.load %arg7[%c0, %c0_1] : memref<16x96xf32, #tpu.memory_space<vmem>>, vector<16x96xf32>
    %c0_2 = arith.constant 0 : index
    %c0_3 = arith.constant 0 : index
    %4 = vector.load %arg3[%c0_2, %c0_3] : memref<16x32xf32, #tpu.memory_space<vmem>>, vector<16x32xf32>
    %5 = arith.truncf %4 : vector<16x32xf32> to vector<16x32xbf16>
    %c0_4 = arith.constant 0 : index
    %c0_5 = arith.constant 0 : index
    %6 = vector.load %arg4[%c0_4, %c0_5] : memref<32x96xf32, #tpu.memory_space<vmem>>, vector<32x96xf32>
    %7 = arith.truncf %6 : vector<32x96xf32> to vector<32x96xbf16>
    %cst = arith.constant dense<0.000000e+00> : vector<16x96xf32>
    %8 = tpu.matmul %5, %7, %cst {dimension_numbers = #tpu.dot_dimension_numbers<[1], [0], [0], [1], [0, 0, 1, 1], [], []>} : vector<16x32xbf16>, vector<32x96xbf16>, vector<16x96xf32> -> vector<16x96xf32>
    %9 = arith.addf %3, %8 : vector<16x96xf32>
    %c0_6 = arith.constant 0 : index
    %c0_7 = arith.constant 0 : index
    %10 = vector.load %arg7[%c0_6, %c0_7] : memref<16x96xf32, #tpu.memory_space<vmem>>, vector<16x96xf32>
    tpu.vector_store %arg7[%c0_6, %c0_7], %9 {strides = array<i32>} : memref<16x96xf32, #tpu.memory_space<vmem>>, vector<16x96xf32>,
    %c0_i32_8 = arith.constant 0 : i32
    %11 = arith.cmpi eq, %arg2, %c0_i32_8 : i32
    %12 = arith.extui %11 : i1 to i32
    %c0_i32_9 = arith.constant 0 : i32
    %13 = arith.cmpi ne, %12, %c0_i32_9 : i32
    scf.if %13 {
      %c0_10 = arith.constant 0 : index
      %c0_11 = arith.constant 0 : index
      %14 = vector.load %arg7[%c0_10, %c0_11] : memref<16x96xf32, #tpu.memory_space<vmem>>, vector<16x96xf32>
      %c0_12 = arith.constant 0 : index
      %c0_13 = arith.constant 0 : index
      %15 = vector.load %arg5[%c0_12, %c0_13] : memref<1x96xf32, #tpu.memory_space<vmem>>, vector<1x96xf32>
      %16 = vector.broadcast %15 : vector<1x96xf32> to vector<16x96xf32>
      %17 = arith.addf %14, %16 : vector<16x96xf32>
      %c0_14 = arith.constant 0 : index
      %c0_15 = arith.constant 0 : index
      %18 = vector.load %arg6[%c0_14, %c0_15] : memref<16x96xf32, #tpu.memory_space<vmem>>, vector<16x96xf32>
      tpu.vector_store %arg6[%c0_14, %c0_15], %17 {strides = array<i32>} : memref<16x96xf32, #tpu.memory_space<vmem>>, vector<16x96xf32>,
    } else {
    }
    return
  }
  func.func @transform_0(%arg0: i32, %arg1: i32, %arg2: i32) -> (i32, i32) {
    %c0_i32 = arith.constant 0 : i32
    return %arg0, %arg2 : i32, i32
  }
  func.func @transform_1(%arg0: i32, %arg1: i32, %arg2: i32) -> (i32, i32) {
    %c0_i32 = arith.constant 0 : i32
    return %arg2, %arg1 : i32, i32
  }
  func.func @transform_2(%arg0: i32, %arg1: i32, %arg2: i32) -> (i32, i32) {
    %c0_i32 = arith.constant 0 : i32
    %c0_i32_0 = arith.constant 0 : i32
    return %c0_i32, %arg1 : i32, i32
  }
  func.func @transform_3(%arg0: i32, %arg1: i32, %arg2: i32) -> (i32, i32) {
    %c0_i32 = arith.constant 0 : i32
    return %arg0, %arg1 : i32, i32
  }
}

</mosaic_0001>

<llo_original>
// kernel: tpu_custom_call.1
$region0: #{tpu_custom_call.1}
  #allocation0 [shape = 'u32[]', space=smem, size = 0x4, offset = 0x4, fixed_abs, tag = 'smem constant byte address 0x4 - core index']
  #allocation1 [shape = 'u32[72,128]{1,0:T(1,128)}', space=vmem, size = 0x9000, scoped, tag = 'internal scratch']
  #allocation2 [shape = 'f32[16,96]{1,0:T(8,128)}', space=vmem, size = 0x2000, scoped, tag = 'scratch operand']
  %s0 = inlined_call_operand.hbm [shape: f32[16,32], index: 0, kind: input, shape index: {}]
  %s1 = inlined_call_operand.hbm [shape: f32[32,96], index: 1, kind: input, shape index: {}]
  %s2 = inlined_call_operand.vmem [shape: f32[1,96], index: 2, kind: input, shape index: {}]
  %s3 = inlined_call_operand.hbm [shape: f32[16,96], index: 3, kind: output, shape index: {}]
  %s4 = sld [smem:[#allocation0]]
  $region38: #{tpu_custom_call.1} parent=0
    _
  %s6 = ssub.s32 1, %s4
  %s7 = scalar_select 0, %s6, %s4
  $region1: #{tpu_custom_call.1} parent=0
    #allocation3 [shape = 'u8[8192]{0}', space=vmem, size = 0x2000, scoped, tag = 'input window, operand 0, single buffered']
    #allocation4 [shape = 's32[1]{0}', space=sflag, size = 0x4, scoped, tag = 'scoped memory for tpu_custom_call.1']
    #allocation5 [shape = 's32[1]{0}', space=sflag, size = 0x4, scoped, tag = 'scoped memory for tpu_custom_call.1']
    #allocation6 [shape = 'u8[16384]{0}', space=vmem, size = 0x4000, scoped, tag = 'input window, operand 1, single buffered']
    #allocation7 [shape = 's32[1]{0}', space=sflag, size = 0x4, scoped, tag = 'scoped memory for tpu_custom_call.1']
    #allocation8 [shape = 'u8[8192]{0}', space=vmem, size = 0x2000, scoped, tag = 'output window, operand 0, single buffered']
    %8 = vsyncpa [#allocation4], 0
    %9 = vsyncpa [#allocation7], 0
    %10 = vsyncpa [#allocation5], 0
    // Predicated region
    $region2: #{tpu_custom_call.1} parent=1 // pred_check
      _
    $region3: #{tpu_custom_call.1} parent=1 // pred_check_branch
      %12 = sbr.rel (0) target = $region5
    $region4: #{tpu_custom_call.1} parent=1 // pred_region
      %14 = vsyncadd [#allocation4], 0
      %s15 = sshll.u32 %s0, 4
      %s16 = int_to_ptr.hbm [resolvable:$true] %s15
      %s17 = sshll.u32 [#allocation3], 4
      %s18 = int_to_ptr.vmem [resolvable:$true] %s17
      %23 = dma.hbm_to_vmem [thread:$0]  %s16, 256, %s18, [#allocation4], 128, 128, 8
    $region5: #{tpu_custom_call.1} parent=1 // pred_fallthru
      _
    // Predicated region
    $region6: #{tpu_custom_call.1} parent=1 // pred_check
      _
    $region7: #{tpu_custom_call.1} parent=1 // pred_check_branch
      %25 = sbr.rel (0) target = $region9
    $region8: #{tpu_custom_call.1} parent=1 // pred_region
      %27 = vsyncadd [#allocation7], 0
      %s28 = sshll.u32 %s1, 4
      %s29 = int_to_ptr.hbm [resolvable:$true] %s28
      %s30 = sshll.u32 [#allocation6], 4
      %s31 = int_to_ptr.vmem [resolvable:$true] %s30
      %36 = dma.hbm_to_vmem [thread:$0]  %s29, 512, %s31, [#allocation7], 128, 128, 8
    $region9: #{tpu_custom_call.1} parent=1 // pred_fallthru
      _
    // Predicated region
    $region10: #{tpu_custom_call.1} parent=1 // pred_check
      _
    $region11: #{tpu_custom_call.1} parent=1 // pred_check_branch
      %38 = sbr.rel (0) target = $region13
    $region12: #{tpu_custom_call.1} parent=1 // pred_region
      _
    $region13: #{tpu_custom_call.1} parent=1 // pred_fallthru
      _
    // Predicated region
    $region14: #{tpu_custom_call.1} parent=1 // pred_check
      _
    $region15: #{tpu_custom_call.1} parent=1 // pred_check_branch
      %40 = sbr.rel (0) target = $region17
    $region16: #{tpu_custom_call.1} parent=1 // pred_region
      %42 = dma.done [#allocation4], 256
    $region17: #{tpu_custom_call.1} parent=1 // pred_fallthru
      _
    // Predicated region
    $region18: #{tpu_custom_call.1} parent=1 // pred_check
      _
    $region19: #{tpu_custom_call.1} parent=1 // pred_check_branch
      %44 = sbr.rel (0) target = $region21
    $region20: #{tpu_custom_call.1} parent=1 // pred_region
      %46 = dma.done [#allocation7], 512
    $region21: #{tpu_custom_call.1} parent=1 // pred_fallthru
      _
    %p48 = scmp.eq.s32.totalorder 0, 0
    // Predicated region
    $region22: #{tpu_custom_call.1} parent=1 // pred_check
      %p49 = pneg %p48
    $region23: #{tpu_custom_call.1} parent=1 // pred_check_branch
      %51 = sbr.rel (%p49) target = $region25
    $region24: #{tpu_custom_call.1} parent=1 // pred_region
      %vm52 = vcmask 785408
      %53 = vst.msk [vmem:[#allocation2] sm:$0xff] %vm52, 0.0
      %54 = vst.msk [vmem:[#allocation2 + $0x8] sm:$0xff] %vm52, 0.0
    $region25: #{tpu_custom_call.1} parent=1 // pred_fallthru
      _
    %v55 = vld [vmem:[#allocation2] sm:$0xff]
    %v56 = vld [vmem:[#allocation2 + $0x8] sm:$0xff]
    %v57 = vld [vmem:[#allocation3] sm:$0xff]
    %v58 = vld [vmem:[#allocation3 + $0x8] sm:$0xff]
    %v59 = vpack.c.bf16 %v58, %v57
    %v60 = vld [vmem:[#allocation6] sm:$0xff]
    %v61 = vld [vmem:[#allocation6 + $0x8] sm:$0xff]
    %v62 = vld [vmem:[#allocation6 + $0x10] sm:$0xff]
    %v63 = vld [vmem:[#allocation6 + $0x18] sm:$0xff]
    %v64 = vpack.c.bf16 %v61, %v60
    %v65 = vpack.c.bf16 %v63, %v62
    %vm66 = vcmask 261120
    %v68 = vsel %vm66, %v59, 0
    %70 = vmatpush.bf16.msra.mxu0 0
    %71 = vmatpush.bf16.msra.mxu0 0
    %72 = vmatpush.bf16.msra.mxu0 0
    %73 = vmatpush.bf16.msra.mxu0 0
    %74 = vmatpush.bf16.msra.mxu0 0
    %75 = vmatpush.bf16.msra.mxu0 0
    %76 = vmatpush.bf16.msra.mxu0 %v65
    %77 = vmatpush.bf16.msra.mxu0 %v64
    %78 = vmatmul.bf16.gmra.mxu0 %v68
    %v79 = vpop.f32.mrf.mxu0
    %v80 = vadd.f32 0.0, %v79
    %v81 = vpop.f32.mrf.mxu0
    %v82 = vadd.f32 0.0, %v81
    %83 = vdwg.mxu0
    %v84 = vadd.f32 %v55, %v80
    %v85 = vadd.f32 %v56, %v82
    %vm86 = vcmask 785408
    %87 = vst.msk [vmem:[#allocation2] sm:$0xff] %vm86, %v84
    %88 = vst.msk [vmem:[#allocation2 + $0x8] sm:$0xff] %vm86, %v85
    // Predicated region
    $region26: #{tpu_custom_call.1} parent=1 // pred_check
      %p89 = pneg %p48
    $region27: #{tpu_custom_call.1} parent=1 // pred_check_branch
      %91 = sbr.rel (%p89) target = $region29
    $region28: #{tpu_custom_call.1} parent=1 // pred_region
      %v92 = vld [vmem:[#allocation2] sm:$0xff]
      %v93 = vld [vmem:[#allocation2 + $0x8] sm:$0xff]
      %v94 = vld [vmem:[%s2] sm:$0x1]
      %v96 = vperm.slane %v94, 0
      %v98 = vadd.f32 %v92, %v96
      %v99 = vadd.f32 %v93, %v96
      %100 = vst.msk [vmem:[#allocation8] sm:$0xff] %vm86, %v98
      %101 = vst.msk [vmem:[#allocation8 + $0x8] sm:$0xff] %vm86, %v99
    $region29: #{tpu_custom_call.1} parent=1 // pred_fallthru
      _
    // Predicated region
    $region30: #{tpu_custom_call.1} parent=1 // pred_check
      _
    $region31: #{tpu_custom_call.1} parent=1 // pred_check_branch
      %103 = sbr.rel (0) target = $region33
    $region32: #{tpu_custom_call.1} parent=1 // pred_region
      %105 = vsyncadd [#allocation5], 0
      %s106 = sshll.u32 [#allocation8], 4
      %s107 = int_to_ptr.vmem [resolvable:$true] %s106
      %s108 = sshll.u32 %s3, 4
      %s109 = int_to_ptr.hbm [resolvable:$true] %s108
      %114 = dma.vmem_to_hbm [thread:$0]  %s107, 256, %s109, [#allocation5], 128, 128, 8
    $region33: #{tpu_custom_call.1} parent=1 // pred_fallthru
      _
    // Predicated region
    $region34: #{tpu_custom_call.1} parent=1 // pred_check
      _
    $region35: #{tpu_custom_call.1} parent=1 // pred_check_branch
      %116 = sbr.rel (0) target = $region37
    $region36: #{tpu_custom_call.1} parent=1 // pred_region
      %118 = dma.done [#allocation5], 256
    $region37: #{tpu_custom_call.1} parent=1 // pred_fallthru
      _
    %119 = vsyncpa [#allocation4], 1
    %120 = vsyncpa [#allocation7], 1
    %121 = vsyncpa [#allocation5], 1

</llo_original>
